<compile_context>
chip_gen: v5e
topology: v5e:2x2
jax: 0.10.0
libtpu: 0.0.40
codegen_flags: <defaults>
</compile_context>

<pallas_src>
import functools

import jax
import jax.numpy as jnp
from jax.experimental import pallas as pl
from jax.experimental.pallas import tpu as pltpu

LAMBDA_GLOBAL = 0.5  # TODO(synk): const.LAMBDA_GLOBAL not available; fixed to 0.5.


def drugncf_kernel(feat_ref, ut_ref, vt_ref, w1_ref, b1_ref, w2_ref, b2_ref,
                   out_ref, *, hd, lam):
    """One batch tile. Activations are feature-major; batch rides the lanes.

    feat_ref : [BT, F]  int8/bf16/f32  drug features, natural row-major layout
    ut_ref   : [K,  BT] f32            U embeddings, feature-major
    vt_ref   : [K,  BT] f32            V embeddings, feature-major
    w1_ref   : [HA, F]  f32            rows 0..hd-1 = W1^T, row hd = w_lr^T, rest 0
    b1_ref   : [HA, 1]  f32            rows 0..hd-1 = b1,   row hd = b_lr,   rest 0
    w2_ref   : [K,  Hd] f32            W2^T
    b2_ref   : [K,  1]  f32
    out_ref  : [1,  BT] f32            sigmoid scores (lane-dense store)
    """
    # Upcast the narrow feature stream in-register (VPU slots are idle here).
    feat = feat_ref[...].astype(jnp.float32)                        # [BT, F]

    # First MXU pass (trans-B): contract F on both operands -> [HA, BT].
    # The LR head rides along as the extra row `hd` of W1^T (no N=1 matmul).
    h1aug = jax.lax.dot_general(
        w1_ref[...], feat,
        dimension_numbers=(((1,), (1,)), ((), ())),
        preferred_element_type=jnp.float32) + b1_ref[...]           # [HA, BT]

    wide_lr = h1aug[hd:hd + 1, :]                  # [1, BT] = (feat @ w_lr + b_lr)^T
    h1 = jnp.maximum(h1aug[:hd, :], 0.0)           # [Hd, BT] ReLU (f32)

    # Second MXU pass: MLP layer 2 -> wide-part embedding.
    wide = jnp.dot(w2_ref[...], h1,
                   preferred_element_type=jnp.float32) + b2_ref[...]  # [K, BT]

    u = ut_ref[...]                                                   # [K, BT] f32
    v = vt_ref[...]                                                   # [K, BT] f32

    # Single fused sublane reduction over K -> lane-dense [1, BT]:
    #   mix = L*wide_lr + sum_k((L*wide + (1-L)*U) * V)
    #       = L*(wide_lr + wide.V) + (1-L)*(U.V)
    mixed = lam * wide + (1.0 - lam) * u
    mix = lam * wide_lr + jnp.sum(mixed * v, axis=0, keepdims=True)

    out_ref[...] = jax.nn.sigmoid(mix)                                # [1, BT]


def drugncf_forward(x, drug_features_x, params, *, block_b=1024):
    """x: int32 [B, 2] (drug idx, ADR idx); drug_features_x: [B, F] (any dtype,
    ideally already narrow: int8 for binary fingerprints, or bf16)."""
    W_table = params["W"]     # [num_users + 1, K] f32
    H_table = params["H"]     # [num_items + 1, K] f32

    B, F = drug_features_x.shape
    K = W_table.shape[1]
    Hd = params["w1"].shape[1]

    # Embedding gathers stay as XLA glue, but index a pre-transposed (tiny)
    # table so the gathered [K, B] arrays come out feature-major with no extra
    # transpose/cast pass over [B, K].
    # TODO(synk): move the gathers in-kernel (PrefetchScalarGridSpec + dynamic
    # row gather) once that path is robust; tables here are a few KiB.
    u_t = W_table.T[:, x[:, 0]]                    # [K, B] f32
    v_t = H_table.T[:, x[:, 1]]                    # [K, B] f32

    # Fold the LR head (w_lr, b_lr) into W1^T / b1 as one extra row, then
    # zero-pad the row count to a multiple of 8 for clean sublane tiling.
    # Weights stay f32: grid-invariant, so bandwidth cost is negligible.
    n_aug = Hd + 1
    ha = ((n_aug + 7) // 8) * 8
    w1_aug = jnp.concatenate(
        [params["w1"].T.astype(jnp.float32),
         params["w_lr"].reshape(1, F).astype(jnp.float32),
         jnp.zeros((ha - n_aug, F), jnp.float32)], axis=0)           # [HA, F]
    b1_aug = jnp.concatenate(
        [params["b1"].reshape(Hd, 1).astype(jnp.float32),
         params["b_lr"].reshape(1, 1).astype(jnp.float32),
         jnp.zeros((ha - n_aug, 1), jnp.float32)], axis=0)           # [HA, 1]
    w2_t = params["w2"].T.astype(jnp.float32)                        # [K, Hd]
    b2 = params["b2"].reshape(K, 1).astype(jnp.float32)              # [K, 1]

    # Batch tiling: as large as block_b allows (multiple of 128), but capped so
    # the grid keeps >= 2 tiles when possible (v7x has two TensorCores). No
    # padding: Pallas masks the ragged tail block.
    block_b = max(128, (block_b // 128) * 128)
    b_ceil = pl.cdiv(B, 128) * 128
    bt_two_tiles = max(128, pl.cdiv(B, 2 * 128) * 128)
    bt = int(min(block_b, bt_two_tiles, b_ceil))
    num_tiles = pl.cdiv(B, bt)

    kernel = functools.partial(drugncf_kernel, hd=Hd, lam=LAMBDA_GLOBAL)

    out = pl.pallas_call(
        kernel,
        out_shape=jax.ShapeDtypeStruct((1, B), jnp.float32),
        grid=(num_tiles,),
        in_specs=[
            pl.BlockSpec((bt, F), lambda i: (i, 0)),   # feat, natural layout (streamed)
            pl.BlockSpec((K, bt), lambda i: (0, i)),   # U^T (streamed)
            pl.BlockSpec((K, bt), lambda i: (0, i)),   # V^T (streamed)
            pl.BlockSpec((ha, F), lambda i: (0, 0)),   # W1^T (+ w_lr row), resident
            pl.BlockSpec((ha, 1), lambda i: (0, 0)),   # b1 (+ b_lr)
            pl.BlockSpec((K, Hd), lambda i: (0, 0)),   # W2^T
            pl.BlockSpec((K, 1), lambda i: (0, 0)),    # b2
        ],
        out_specs=pl.BlockSpec((1, bt), lambda i: (0, i)),   # lane-dense output
        compiler_params=pltpu.CompilerParams(
            dimension_semantics=("parallel",),          # shards tiles over v7x's 2 TCs
            vmem_limit_bytes=48 * 1024 * 1024),         # roomy on v5e/v6e, safe on v7x
    )(drug_features_x, u_t, v_t, w1_aug, b1_aug, w2_t, b2)

    return out.reshape(-1)                              # matches torch: sigmoid(out.reshape(-1))


def init_params(key, num_users, num_items, embed_dim, feat_dim, hidden_dim):
    ks = jax.random.split(key, 8)
    s = 0.1
    return {
        "W":    s * jax.random.normal(ks[0], (num_users + 1, embed_dim), jnp.float32),
        "H":    s * jax.random.normal(ks[1], (num_items + 1, embed_dim), jnp.float32),
        "w1":   s * jax.random.normal(ks[2], (feat_dim, hidden_dim), jnp.float32),
        "b1":   0.01 * jax.random.normal(ks[3], (hidden_dim,), jnp.float32),
        "w2":   s * jax.random.normal(ks[4], (hidden_dim, embed_dim), jnp.float32),
        "b2":   0.01 * jax.random.normal(ks[5], (embed_dim,), jnp.float32),
        "w_lr": s * jax.random.normal(ks[6], (feat_dim,), jnp.float32),
        "b_lr": 0.01 * jax.random.normal(ks[7], (), jnp.float32),
    }


if __name__ == "__main__":
    key = jax.random.PRNGKey(0)

    K = 32            # embed_dim
    F = 64            # sum(field_dims) = drug fingerprint dim
    Hd = 32           # mlp_dims_wide = [32]
    num_users = 20    # drugs
    num_items = 10    # ADRs
    B = num_users * num_items   # 200 drug-ADR pairs -> 2 ragged batch tiles of 128

    k_u, k_i, k_f, k_p = jax.random.split(key, 4)
    user_idx = jax.random.randint(k_u, (B,), 0, num_users, dtype=jnp.int32)
    item_idx = jax.random.randint(k_i, (B,), 0, num_items, dtype=jnp.int32)
    x = jnp.stack([user_idx, item_idx], axis=1)                       # [B, 2]

    # Binary fingerprint-style drug features, shipped as int8 (exact, 1 B/elem).
    drug_features_x = jax.random.bernoulli(k_f, 0.3, (B, F)).astype(jnp.int8)

    params = init_params(k_p, num_users, num_items, K, F, Hd)

    fwd = jax.jit(functools.partial(drugncf_forward, block_b=1024))
    out = fwd(x, drug_features_x, params)
    jax.block_until_ready(out)

    # Pure-JAX f32 reference of the torch forward pass.
    feat_f32 = drug_features_x.astype(jnp.float32)
    u_ref = params["W"][x[:, 0]]
    v_ref = params["H"][x[:, 1]]
    h1 = jnp.maximum(feat_f32 @ params["w1"] + params["b1"], 0.0)
    wide = h1 @ params["w2"] + params["b2"]
    wide_dot = jnp.sum(wide * v_ref, axis=1)
    wide_lr = feat_f32 @ params["w_lr"] + params["b_lr"]
    mf = jnp.sum(u_ref * v_ref, axis=1)
    ref = jax.nn.sigmoid(LAMBDA_GLOBAL * (wide_lr + wide_dot)
                         + (1.0 - LAMBDA_GLOBAL) * mf)

    assert out.shape == (B,)
    err = float(jnp.max(jnp.abs(out - ref)))
    # Kernel math is f32 end-to-end (features are exact int8 0/1); tolerance is
    # loose only because the XLA reference uses default-precision f32 matmuls.
    assert err < 2e-2, f"max abs err {err}"

    print("KERNEL_OK")
</pallas_src>

<mosaic_0001>
module attributes {stable_mosaic.version = 11 : i64} {
  func.func @drugncf_kernel(%arg0: i32, %arg1: memref<128x64xi8, #tpu.memory_space<vmem>>, %arg2: memref<32x128xf32, #tpu.memory_space<vmem>>, %arg3: memref<32x128xf32, #tpu.memory_space<vmem>>, %arg4: memref<40x64xf32, #tpu.memory_space<vmem>>, %arg5: memref<40x1xf32, #tpu.memory_space<vmem>>, %arg6: memref<32x32xf32, #tpu.memory_space<vmem>>, %arg7: memref<32x1xf32, #tpu.memory_space<vmem>>, %arg8: memref<1x128xf32, #tpu.memory_space<vmem>>) attributes {dimension_semantics = [#tpu.dimension_semantics<parallel>], iteration_bounds = array<i64: 2>, scalar_prefetch = 0 : i64, scratch_operands = 0 : i64, tpu.core_type = #tpu.core_type<tc>, window_params = [{transform_indices = @transform_0, window_bounds = array<i64: 128, 64>}, {transform_indices = @transform_1, window_bounds = array<i64: 32, 128>}, {transform_indices = @transform_2, window_bounds = array<i64: 32, 128>}, {pipeline_mode = #tpu.pipeline_mode<synchronous>, transform_indices = @transform_3, window_bounds = array<i64: 40, 64>}, {pipeline_mode = #tpu.pipeline_mode<synchronous>, transform_indices = @transform_4, window_bounds = array<i64: 40, 1>}, {pipeline_mode = #tpu.pipeline_mode<synchronous>, transform_indices = @transform_5, window_bounds = array<i64: 32, 32>}, {pipeline_mode = #tpu.pipeline_mode<synchronous>, transform_indices = @transform_6, window_bounds = array<i64: 32, 1>}, {transform_indices = @transform_7, window_bounds = array<i64: 1, 128>}]} {
    %c0 = arith.constant 0 : index
    %c0_0 = arith.constant 0 : index
    %0 = vector.load %arg1[%c0, %c0_0] : memref<128x64xi8, #tpu.memory_space<vmem>>, vector<128x64xi8>
    %1 = arith.sitofp %0 : vector<128x64xi8> to vector<128x64xf32>
    %c0_1 = arith.constant 0 : index
    %c0_2 = arith.constant 0 : index
    %2 = vector.load %arg4[%c0_1, %c0_2] : memref<40x64xf32, #tpu.memory_space<vmem>>, vector<40x64xf32>
    %cst = arith.constant dense<0.000000e+00> : vector<40x128xf32>
    %3 = tpu.matmul %2, %1, %cst {dimension_numbers = #tpu.dot_dimension_numbers<[1], [1], [0], [0], [0, 0, 1, 0], [], []>} : vector<40x64xf32>, vector<128x64xf32>, vector<40x128xf32> -> vector<40x128xf32>
    %c0_3 = arith.constant 0 : index
    %c0_4 = arith.constant 0 : index
    %4 = vector.load %arg5[%c0_3, %c0_4] : memref<40x1xf32, #tpu.memory_space<vmem>>, vector<40x1xf32>
    %5 = vector.broadcast %4 : vector<40x1xf32> to vector<40x128xf32>
    %6 = arith.addf %3, %5 : vector<40x128xf32>
    %7 = vector.extract_strided_slice %6 {offsets = [32, 0], sizes = [1, 128], strides = [1, 1]} : vector<40x128xf32> to vector<1x128xf32>
    %8 = vector.extract_strided_slice %6 {offsets = [0, 0], sizes = [32, 128], strides = [1, 1]} : vector<40x128xf32> to vector<32x128xf32>
    %cst_5 = arith.constant 0.000000e+00 : f32
    %9 = vector.broadcast %cst_5 : f32 to vector<32x128xf32>
    %10 = arith.maximumf %8, %9 : vector<32x128xf32>
    %c0_6 = arith.constant 0 : index
    %c0_7 = arith.constant 0 : index
    %11 = vector.load %arg6[%c0_6, %c0_7] : memref<32x32xf32, #tpu.memory_space<vmem>>, vector<32x32xf32>
    %cst_8 = arith.constant dense<0.000000e+00> : vector<32x128xf32>
    %12 = tpu.matmul %11, %10, %cst_8 {dimension_numbers = #tpu.dot_dimension_numbers<[1], [0], [0], [1], [0, 0, 1, 1], [], []>} : vector<32x32xf32>, vector<32x128xf32>, vector<32x128xf32> -> vector<32x128xf32>
    %c0_9 = arith.constant 0 : index
    %c0_10 = arith.constant 0 : index
    %13 = vector.load %arg7[%c0_9, %c0_10] : memref<32x1xf32, #tpu.memory_space<vmem>>, vector<32x1xf32>
    %14 = vector.broadcast %13 : vector<32x1xf32> to vector<32x128xf32>
    %15 = arith.addf %12, %14 : vector<32x128xf32>
    %c0_11 = arith.constant 0 : index
    %c0_12 = arith.constant 0 : index
    %16 = vector.load %arg2[%c0_11, %c0_12] : memref<32x128xf32, #tpu.memory_space<vmem>>, vector<32x128xf32>
    %c0_13 = arith.constant 0 : index
    %c0_14 = arith.constant 0 : index
    %17 = vector.load %arg3[%c0_13, %c0_14] : memref<32x128xf32, #tpu.memory_space<vmem>>, vector<32x128xf32>
    %cst_15 = arith.constant 5.000000e-01 : f32
    %18 = vector.broadcast %cst_15 : f32 to vector<32x128xf32>
    %19 = arith.mulf %18, %15 : vector<32x128xf32>
    %cst_16 = arith.constant 5.000000e-01 : f32
    %20 = vector.broadcast %cst_16 : f32 to vector<32x128xf32>
    %21 = arith.mulf %20, %16 : vector<32x128xf32>
    %22 = arith.addf %19, %21 : vector<32x128xf32>
    %cst_17 = arith.constant 5.000000e-01 : f32
    %23 = vector.broadcast %cst_17 : f32 to vector<1x128xf32>
    %24 = arith.mulf %23, %7 : vector<1x128xf32>
    %25 = arith.mulf %22, %17 : vector<32x128xf32>
    %cst_18 = arith.constant dense<0.000000e+00> : vector<128xf32>
    %26 = vector.multi_reduction <add>, %25, %cst_18 [0] : vector<32x128xf32> to vector<128xf32>
    %27 = vector.shape_cast %26 : vector<128xf32> to vector<1x128xf32>
    %28 = arith.addf %24, %27 : vector<1x128xf32>
    %29 = arith.negf %28 : vector<1x128xf32>
    %30 = math.exp %29 : vector<1x128xf32>
    %cst_19 = arith.constant 1.000000e+00 : f32
    %31 = vector.broadcast %cst_19 : f32 to vector<1x128xf32>
    %32 = arith.addf %31, %30 : vector<1x128xf32>
    %33 = arith.divf %31, %32 : vector<1x128xf32>
    %c0_20 = arith.constant 0 : index
    %c0_21 = arith.constant 0 : index
    %34 = vector.load %arg8[%c0_20, %c0_21] : memref<1x128xf32, #tpu.memory_space<vmem>>, vector<1x128xf32>
    tpu.vector_store %arg8[%c0_20, %c0_21], %33 {strides = array<i32>} : memref<1x128xf32, #tpu.memory_space<vmem>>, vector<1x128xf32>,
    return
  }
  func.func @transform_0(%arg0: i32) -> (i32, i32) {
    %c0_i32 = arith.constant 0 : i32
    %c0_i32_0 = arith.constant 0 : i32
    return %arg0, %c0_i32 : i32, i32
  }
  func.func @transform_1(%arg0: i32) -> (i32, i32) {
    %c0_i32 = arith.constant 0 : i32
    %c0_i32_0 = arith.constant 0 : i32
    return %c0_i32, %arg0 : i32, i32
  }
  func.func @transform_2(%arg0: i32) -> (i32, i32) {
    %c0_i32 = arith.constant 0 : i32
    %c0_i32_0 = arith.constant 0 : i32
    return %c0_i32, %arg0 : i32, i32
  }
  func.func @transform_3(%arg0: i32) -> (i32, i32) {
    %c0_i32 = arith.constant 0 : i32
    %c0_i32_0 = arith.constant 0 : i32
    %c0_i32_1 = arith.constant 0 : i32
    return %c0_i32, %c0_i32_0 : i32, i32
  }
  func.func @transform_4(%arg0: i32) -> (i32, i32) {
    %c0_i32 = arith.constant 0 : i32
    %c0_i32_0 = arith.constant 0 : i32
    %c0_i32_1 = arith.constant 0 : i32
    return %c0_i32, %c0_i32_0 : i32, i32
  }
  func.func @transform_5(%arg0: i32) -> (i32, i32) {
    %c0_i32 = arith.constant 0 : i32
    %c0_i32_0 = arith.constant 0 : i32
    %c0_i32_1 = arith.constant 0 : i32
    return %c0_i32, %c0_i32_0 : i32, i32
  }
  func.func @transform_6(%arg0: i32) -> (i32, i32) {
    %c0_i32 = arith.constant 0 : i32
    %c0_i32_0 = arith.constant 0 : i32
    %c0_i32_1 = arith.constant 0 : i32
    return %c0_i32, %c0_i32_0 : i32, i32
  }
  func.func @transform_7(%arg0: i32) -> (i32, i32) {
    %c0_i32 = arith.constant 0 : i32
    %c0_i32_0 = arith.constant 0 : i32
    return %c0_i32, %arg0 : i32, i32
  }
}

</mosaic_0001>

<llo_original>
// kernel: drugncf_forward.1
$region0: #{drugncf_forward.1}
  #allocation0 [shape = 'u32[]', space=smem, size = 0x4, offset = 0x4, fixed_abs, tag = 'smem constant byte address 0x4 - core index']
  #allocation1 [shape = 'u32[72,128]{1,0:T(1,128)}', space=vmem, size = 0x9000, scoped, tag = 'internal scratch']
  %s0 = inlined_call_operand.vmem [shape: s8[200,64], index: 0, kind: input, shape index: {}]
  %s1 = inlined_call_operand.vmem [shape: f32[32,200], index: 1, kind: input, shape index: {}]
  %s2 = inlined_call_operand.vmem [shape: f32[32,200], index: 2, kind: input, shape index: {}]
  %s3 = inlined_call_operand.vmem [shape: f32[40,64], index: 3, kind: input, shape index: {}]
  %s4 = inlined_call_operand.vmem [shape: f32[40,1], index: 4, kind: input, shape index: {}]
  %s5 = inlined_call_operand.vmem [shape: f32[32,32], index: 5, kind: input, shape index: {}]
  %s6 = inlined_call_operand.vmem [shape: f32[32,1], index: 6, kind: input, shape index: {}]
  %s7 = inlined_call_operand.hbm [shape: f32[1,200], index: 7, kind: output, shape index: {}]
  %s8 = sld [smem:[#allocation0]]
  $region137: #{drugncf_forward.1} parent=0
    _
  %s10 = ssub.s32 1, %s8
  %s11 = scalar_select 0, %s10, %s8
  $region1: #{drugncf_forward.1} parent=0
    #allocation2 [shape = 'u8[32768]{0}', space=vmem, size = 0x8000, scoped, tag = 'input window, operand 1']
    #allocation3 [shape = 'u8[32768]{0}', space=vmem, size = 0x8000, scoped, tag = 'input window, operand 2']
    #allocation4 [shape = 'u8[1024]{0}', space=vmem, size = 0x400, scoped, tag = 'output window, operand 0']
    #allocation5 [shape = 's32[2]{0}', space=sflag, size = 0x8, scoped, tag = 'scoped memory for drugncf_forward.1']
    %12 = vsyncpa [#allocation5], 0
    %s13 = scalar_lea.sflag [#allocation5], 1
    %14 = vsyncpa %s13, 0
    loop: start=0, step=1, limit=4
    $region2: #{drugncf_forward.1} parent=1 // loop_pre_header
      _
    $region3: #{drugncf_forward.1} parent=1 // loop_header
      %s16 = sphi 0, %s20
      %p17 = scmp.ge.s32.totalorder %s16, 4
      %s26 = sphi 0, %s28
      %s29 = sphi 0, %s26
      %s30 = sphi 0, %s29
      %s46 = sphi 0, %s30
      %s52 = sphi 0, %s54
      %s55 = sphi 0, %s52
      %s56 = sphi 0, %s55
      %s72 = sphi 0, %s56
      %s78 = sphi 0, %s80
      %s81 = sphi 0, %s78
      %s82 = sphi 0, %s81
      %s98 = sphi 0, %s82
      %s102 = sphi 0, %s102
      %s104 = sphi 0, %s102
      %s105 = sphi 0, %s104
      %s119 = sphi 0, %s105
      %s123 = sphi 0, %s123
      %s125 = sphi 0, %s123
      %s126 = sphi 0, %s125
      %s140 = sphi 0, %s126
      %s144 = sphi 0, %s144
      %s146 = sphi 0, %s144
      %s147 = sphi 0, %s146
      %s161 = sphi 0, %s147
      %s165 = sphi 0, %s165
      %s167 = sphi 0, %s165
      %s168 = sphi 0, %s167
      %s182 = sphi 0, %s168
      %s188 = sphi 0, %s190
      %s191 = sphi 0, %s188
      %s192 = sphi 0, %s191
      %s208 = sphi 0, %s192
    $region4: #{drugncf_forward.1} parent=1 // loop_header_branch
      %19 = sbr.rel (%p17) target = $region8
    $region5: #{drugncf_forward.1} parent=1 // loop_body
      %s21 = ssub.s32 %s16, 1
      %s22 = ssub.s32 %s16, 2
      %s23 = sadd.s32 %s16, 1
      %s24 = ssub.s32 %s16, %s23
      %p25 = scmp.eq.s32.totalorder %s24, 0
      %s27 = sadd.s32 %s26, 1
      %s28 = scalar_select %p25, %s26, %s27
      %p31 = pneg %p25
      %p32 = scmp.eq.s32.totalorder %s16, 1
      %p33 = por %p31, %p32
      %p34 = scmp.ne.s32.totalorder %s26, %s29
      %p35 = scmp.eq.s32.totalorder %s16, 0
      %p36 = por %p34, %p35
      %p37 = scmp.ne.s32.totalorder %s26, %s29
      %p38 = scmp.eq.s32.totalorder %s21, 1
      %p39 = por %p37, %p38
      %p40 = scmp.ne.s32.totalorder %s29, %s30
      %p41 = scmp.eq.s32.totalorder %s21, 0
      %p42 = por %p40, %p41
      %p43 = scmp.ne.s32.totalorder %s29, %s30
      %p44 = scmp.eq.s32.totalorder %s22, 1
      %p45 = por %p43, %p44
      %p47 = scmp.ne.s32.totalorder %s30, %s46
      %p48 = scmp.eq.s32.totalorder %s22, 0
      %p49 = por %p47, %p48
      %s50 = ssub.s32 %s16, %s23
      %p51 = scmp.eq.s32.totalorder %s50, 0
      %s53 = sadd.s32 %s52, 1
      %s54 = scalar_select %p51, %s52, %s53
      %p57 = pneg %p51
      %p58 = scmp.eq.s32.totalorder %s16, 1
      %p59 = por %p57, %p58
      %p60 = scmp.ne.s32.totalorder %s52, %s55
      %p61 = scmp.eq.s32.totalorder %s16, 0
      %p62 = por %p60, %p61
      %p63 = scmp.ne.s32.totalorder %s52, %s55
      %p64 = scmp.eq.s32.totalorder %s21, 1
      %p65 = por %p63, %p64
      %p66 = scmp.ne.s32.totalorder %s55, %s56
      %p67 = scmp.eq.s32.totalorder %s21, 0
      %p68 = por %p66, %p67
      %p69 = scmp.ne.s32.totalorder %s55, %s56
      %p70 = scmp.eq.s32.totalorder %s22, 1
      %p71 = por %p69, %p70
      %p73 = scmp.ne.s32.totalorder %s56, %s72
      %p74 = scmp.eq.s32.totalorder %s22, 0
      %p75 = por %p73, %p74
      %s76 = ssub.s32 %s16, %s23
      %p77 = scmp.eq.s32.totalorder %s76, 0
      %s79 = sadd.s32 %s78, 1
      %s80 = scalar_select %p77, %s78, %s79
      %p83 = pneg %p77
      %p84 = scmp.eq.s32.totalorder %s16, 1
      %p85 = por %p83, %p84
      %p86 = scmp.ne.s32.totalorder %s78, %s81
      %p87 = scmp.eq.s32.totalorder %s16, 0
      %p88 = por %p86, %p87
      %p89 = scmp.ne.s32.totalorder %s78, %s81
      %p90 = scmp.eq.s32.totalorder %s21, 1
      %p91 = por %p89, %p90
      %p92 = scmp.ne.s32.totalorder %s81, %s82
      %p93 = scmp.eq.s32.totalorder %s21, 0
      %p94 = por %p92, %p93
      %p95 = scmp.ne.s32.totalorder %s81, %s82
      %p96 = scmp.eq.s32.totalorder %s22, 1
      %p97 = por %p95, %p96
      %p99 = scmp.ne.s32.totalorder %s82, %s98
      %p100 = scmp.eq.s32.totalorder %s22, 0
      %p101 = por %p99, %p100
      %s103 = sadd.s32 %s102, 1
      %p106 = scmp.eq.s32.totalorder %s16, 1
      %p107 = scmp.ne.s32.totalorder %s102, %s104
      %p108 = scmp.eq.s32.totalorder %s16, 0
      %p109 = por %p107, %p108
      %p110 = scmp.ne.s32.totalorder %s102, %s104
      %p111 = scmp.eq.s32.totalorder %s21, 1
      %p112 = por %p110, %p111
      %p113 = scmp.ne.s32.totalorder %s104, %s105
      %p114 = scmp.eq.s32.totalorder %s21, 0
      %p115 = por %p113, %p114
      %p116 = scmp.ne.s32.totalorder %s104, %s105
      %p117 = scmp.eq.s32.totalorder %s22, 1
      %p118 = por %p116, %p117
      %p120 = scmp.ne.s32.totalorder %s105, %s119
      %p121 = scmp.eq.s32.totalorder %s22, 0
      %p122 = por %p120, %p121
      %s124 = sadd.s32 %s123, 1
      %p127 = scmp.eq.s32.totalorder %s16, 1
      %p128 = scmp.ne.s32.totalorder %s123, %s125
      %p129 = scmp.eq.s32.totalorder %s16, 0
      %p130 = por %p128, %p129
      %p131 = scmp.ne.s32.totalorder %s123, %s125
      %p132 = scmp.eq.s32.totalorder %s21, 1
      %p133 = por %p131, %p132
      %p134 = scmp.ne.s32.totalorder %s125, %s126
      %p135 = scmp.eq.s32.totalorder %s21, 0
      %p136 = por %p134, %p135
      %p137 = scmp.ne.s32.totalorder %s125, %s126
      %p138 = scmp.eq.s32.totalorder %s22, 1
      %p139 = por %p137, %p138
      %p141 = scmp.ne.s32.totalorder %s126, %s140
      %p142 = scmp.eq.s32.totalorder %s22, 0
      %p143 = por %p141, %p142
      %s145 = sadd.s32 %s144, 1
      %p148 = scmp.eq.s32.totalorder %s16, 1
      %p149 = scmp.ne.s32.totalorder %s144, %s146
      %p150 = scmp.eq.s32.totalorder %s16, 0
      %p151 = por %p149, %p150
      %p152 = scmp.ne.s32.totalorder %s144, %s146
      %p153 = scmp.eq.s32.totalorder %s21, 1
      %p154 = por %p152, %p153
      %p155 = scmp.ne.s32.totalorder %s146, %s147
      %p156 = scmp.eq.s32.totalorder %s21, 0
      %p157 = por %p155, %p156
      %p158 = scmp.ne.s32.totalorder %s146, %s147
      %p159 = scmp.eq.s32.totalorder %s22, 1
      %p160 = por %p158, %p159
      %p162 = scmp.ne.s32.totalorder %s147, %s161
      %p163 = scmp.eq.s32.totalorder %s22, 0
      %p164 = por %p162, %p163
      %s166 = sadd.s32 %s165, 1
      %p169 = scmp.eq.s32.totalorder %s16, 1
      %p170 = scmp.ne.s32.totalorder %s165, %s167
      %p171 = scmp.eq.s32.totalorder %s16, 0
      %p172 = por %p170, %p171
      %p173 = scmp.ne.s32.totalorder %s165, %s167
      %p174 = scmp.eq.s32.totalorder %s21, 1
      %p175 = por %p173, %p174
      %p176 = scmp.ne.s32.totalorder %s167, %s168
      %p177 = scmp.eq.s32.totalorder %s21, 0
      %p178 = por %p176, %p177
      %p179 = scmp.ne.s32.totalorder %s167, %s168
      %p180 = scmp.eq.s32.totalorder %s22, 1
      %p181 = por %p179, %p180
      %p183 = scmp.ne.s32.totalorder %s168, %s182
      %p184 = scmp.eq.s32.totalorder %s22, 0
      %p185 = por %p183, %p184
      %s186 = ssub.s32 %s16, %s23
      %p187 = scmp.eq.s32.totalorder %s186, 0
      %s189 = sadd.s32 %s188, 1
      %s190 = scalar_select %p187, %s188, %s189
      %p193 = pneg %p187
      %p194 = scmp.eq.s32.totalorder %s16, 1
      %p195 = por %p193, %p194
      %p196 = scmp.ne.s32.totalorder %s188, %s191
      %p197 = scmp.eq.s32.totalorder %s16, 0
      %p198 = por %p196, %p197
      %p199 = scmp.ne.s32.totalorder %s188, %s191
      %p200 = scmp.eq.s32.totalorder %s21, 1
      %p201 = por %p199, %p200
      %p202 = scmp.ne.s32.totalorder %s191, %s192
      %p203 = scmp.eq.s32.totalorder %s21, 0
      %p204 = por %p202, %p203
      %p205 = scmp.ne.s32.totalorder %s191, %s192
      %p206 = scmp.eq.s32.totalorder %s22, 1
      %p207 = por %p205, %p206
      %p209 = scmp.ne.s32.totalorder %s192, %s208
      %p210 = scmp.eq.s32.totalorder %s22, 0
      %p211 = por %p209, %p210
      %p212 = scmp.le.s32.totalorder 1, %s16
      %p213 = scmp.lt.s32.totalorder %s16, 3
      %p214 = pnand %p212, %p213
      %p215 = pneg %p214
      // Predicated region
      $region9: #{drugncf_forward.1} parent=5 // pred_check
        _
      $region10: #{drugncf_forward.1} parent=5 // pred_check_branch
        %217 = sbr.rel (%p214) target = $region12
      $region11: #{drugncf_forward.1} parent=5 // pred_region
        %s218 = ssub.s32 %s16, 1
        // Predicated region
        $region13: #{drugncf_forward.1} parent=11 // pred_check
          %p219 = pneg %p115
        $region14: #{drugncf_forward.1} parent=11 // pred_check_branch
          %221 = sbr.rel (%p219) target = $region16
        $region15: #{drugncf_forward.1} parent=11 // pred_region
          _
        $region16: #{drugncf_forward.1} parent=11 // pred_fallthru
          _
        // Predicated region
        $region17: #{drugncf_forward.1} parent=11 // pred_check
          %p222 = pneg %p136
        $region18: #{drugncf_forward.1} parent=11 // pred_check_branch
          %224 = sbr.rel (%p222) target = $region20
        $region19: #{drugncf_forward.1} parent=11 // pred_region
          _
        $region20: #{drugncf_forward.1} parent=11 // pred_fallthru
          _
        // Predicated region
        $region21: #{drugncf_forward.1} parent=11 // pred_check
          %p225 = pneg %p157
        $region22: #{drugncf_forward.1} parent=11 // pred_check_branch
          %227 = sbr.rel (%p225) target = $region24
        $region23: #{drugncf_forward.1} parent=11 // pred_region
          _
        $region24: #{drugncf_forward.1} parent=11 // pred_fallthru
          _
        // Predicated region
        $region25: #{drugncf_forward.1} parent=11 // pred_check
          %p228 = pneg %p178
        $region26: #{drugncf_forward.1} parent=11 // pred_check_branch
          %230 = sbr.rel (%p228) target = $region28
        $region27: #{drugncf_forward.1} parent=11 // pred_region
          _
        $region28: #{drugncf_forward.1} parent=11 // pred_fallthru
          _
      $region12: #{drugncf_forward.1} parent=5 // pred_fallthru
        _
      %p231 = scmp.lt.s32.totalorder %s16, 2
      // Predicated region
      $region29: #{drugncf_forward.1} parent=5 // pred_check
        %p232 = pneg %p231
      $region30: #{drugncf_forward.1} parent=5 // pred_check_branch
        %234 = sbr.rel (%p232) target = $region32
      $region31: #{drugncf_forward.1} parent=5 // pred_region
        // Predicated region
        $region33: #{drugncf_forward.1} parent=31 // pred_check
          %p235 = pneg %p36
        $region34: #{drugncf_forward.1} parent=31 // pred_check_branch
          %237 = sbr.rel (%p235) target = $region36
        $region35: #{drugncf_forward.1} parent=31 // pred_region
          %s238 = smul.u32 16, %s16
          %s239 = ssub.s32 25, %s238
          %p240 = scmp.lt.s32.totalorder %s239, 16
          %s241 = scalar_select %p240, %s239, 16
          %s242 = smul.u32 2, %s241
          %p243 = scmp.lt.s32.totalorder %s238, 24
          %s244 = scalar_select %p243, %s238, 24
          %s245 = smul.addr %s244, 2
          %s246 = scalar_lea.vmem %s0, %s245
          %s247 = smul.u32 16, %s16
          %s248 = ssub.s32 25, %s247
          %p249 = scmp.lt.s32.totalorder %s248, 16
          %s250 = scalar_select %p249, %s248, 16
          %s251 = smul.u32 2, %s250
        $region36: #{drugncf_forward.1} parent=31 // pred_fallthru
          _
        // Predicated region
        $region37: #{drugncf_forward.1} parent=31 // pred_check
          %p252 = pneg %p62
        $region38: #{drugncf_forward.1} parent=31 // pred_check_branch
          %254 = sbr.rel (%p252) target = $region40
        $region39: #{drugncf_forward.1} parent=31 // pred_region
          %s255 = sand.u32 %s52, 1
          %s256 = sand.u32 %s52, 1
          %s257 = smul.addr %s256, 32
          %s258 = scalar_lea.vmem [#allocation2], %s257
          %s259 = smul.addr %s16, 8
          %s260 = scalar_lea.vmem %s1, %s259
          // Predicated region
          $region41: #{drugncf_forward.1} parent=39 // pred_check
            _
          $region42: #{drugncf_forward.1} parent=39 // pred_check_branch
            %262 = sbr.rel (0) target = $region44
          $region43: #{drugncf_forward.1} parent=39 // pred_region
            // Predicated region
            $region45: #{drugncf_forward.1} parent=43 // pred_check
              _
            $region46: #{drugncf_forward.1} parent=43 // pred_check_branch
              %264 = sbr.rel (0) target = $region48
            $region47: #{drugncf_forward.1} parent=43 // pred_region
              // Predicated region
              $region60: #{drugncf_forward.1} parent=47 // pred_check
                _
              $region61: #{drugncf_forward.1} parent=47 // pred_check_branch
                %286 = sbr.rel (0) target = $region63
              $region62: #{drugncf_forward.1} parent=47 // pred_region
                loop: start=0, step=1, limit=1
                $region64: #{drugncf_forward.1} parent=62 // loop_pre_header
                  _
                $region65: #{drugncf_forward.1} parent=62 // loop_header
                  %s288 = sphi 0, %s292
                  %p289 = scmp.ge.s32.totalorder %s288, 1
                  %s293 = sphi %s260, %s260
                  %s294 = sphi %s258, %s258
                $region66: #{drugncf_forward.1} parent=62 // loop_header_branch
                  %291 = sbr.rel (%p289) target = $region70
                $region67: #{drugncf_forward.1} parent=62 // loop_body
                  %v295 = vld [vmem:[%s293] sm:$0xff]
                  %296 = vst [vmem:[%s294] sm:$0xff] %v295
                  %v297 = vld [vmem:[%s293 + $0x10] sm:$0xff]
                  %298 = vst [vmem:[%s294 + $0x8] sm:$0xff] %v297
                  %v299 = vld [vmem:[%s293 + $0x20] sm:$0xff]
                  %300 = vst [vmem:[%s294 + $0x10] sm:$0xff] %v299
                  %v301 = vld [vmem:[%s293 + $0x30] sm:$0xff]
                  %302 = vst [vmem:[%s294 + $0x18] sm:$0xff] %v301
                $region68: #{drugncf_forward.1} parent=62 // loop_footer
                  %s292 = sadd.s32 1, %s288
                $region69: #{drugncf_forward.1} parent=62 // loop_footer_branch
                  %287 = sbr.rel target = $region65
                $region70: #{drugncf_forward.1} parent=62 // loop_exit
                  _
              $region63: #{drugncf_forward.1} parent=47 // pred_fallthru
                _
              // Predicated region
              $region71: #{drugncf_forward.1} parent=47 // pred_check
                _
              $region72: #{drugncf_forward.1} parent=47 // pred_check_branch
                %304 = sbr.rel target = $region74
              $region73: #{drugncf_forward.1} parent=47 // pred_region
                _
              $region74: #{drugncf_forward.1} parent=47 // pred_fallthru
                _
            $region48: #{drugncf_forward.1} parent=43 // pred_fallthru
              _
            // Predicated region
            $region49: #{drugncf_forward.1} parent=43 // pred_check
              _
            $region50: #{drugncf_forward.1} parent=43 // pred_check_branch
              %266 = sbr.rel target = $region52
            $region51: #{drugncf_forward.1} parent=43 // pred_region
              %s268 = ssub.s32 256, 1
              loop: start=0, step=1, limit=1
              $region53: #{drugncf_forward.1} parent=51 // loop_pre_header
                _
              $region54: #{drugncf_forward.1} parent=51 // loop_header
                %s270 = sphi 0, %s274
                %p271 = scmp.ge.s32.totalorder %s270, 1
                %s275 = sphi %s260, %s260
                %s276 = sphi %s258, %s258
              $region55: #{drugncf_forward.1} parent=51 // loop_header_branch
                %273 = sbr.rel (%p271) target = $region59
              $region56: #{drugncf_forward.1} parent=51 // loop_body
                %v277 = vld [vmem:[%s275] sm:%s268]
                %278 = vst [vmem:[%s276] sm:%s268] %v277
                %v279 = vld [vmem:[%s275 + $0x10] sm:%s268]
                %280 = vst [vmem:[%s276 + $0x8] sm:%s268] %v279
                %v281 = vld [vmem:[%s275 + $0x20] sm:%s268]
                %282 = vst [vmem:[%s276 + $0x10] sm:%s268] %v281
                %v283 = vld [vmem:[%s275 + $0x30] sm:%s268]
                %284 = vst [vmem:[%s276 + $0x18] sm:%s268] %v283
              $region57: #{drugncf_forward.1} parent=51 // loop_footer
                %s274 = sadd.s32 1, %s270
              $region58: #{drugncf_forward.1} parent=51 // loop_footer_branch
                %269 = sbr.rel target = $region54
              $region59: #{drugncf_forward.1} parent=51 // loop_exit
                _
            $region52: #{drugncf_forward.1} parent=43 // pred_fallthru
              _
          $region44: #{drugncf_forward.1} parent=39 // pred_fallthru
            _
          %305 = vnop
        $region40: #{drugncf_forward.1} parent=31 // pred_fallthru
          _
        // Predicated region
        $region75: #{drugncf_forward.1} parent=31 // pred_check
          %p306 = pneg %p88
        $region76: #{drugncf_forward.1} parent=31 // pred_check_branch
          %308 = sbr.rel (%p306) target = $region78
        $region77: #{drugncf_forward.1} parent=31 // pred_region
          %s309 = sand.u32 %s78, 1
          %s310 = sand.u32 %s78, 1
          %s311 = smul.addr %s310, 32
          %s312 = scalar_lea.vmem [#allocation3], %s311
          %s313 = smul.addr %s16, 8
          %s314 = scalar_lea.vmem %s2, %s313
          // Predicated region
          $region79: #{drugncf_forward.1} parent=77 // pred_check
            _
          $region80: #{drugncf_forward.1} parent=77 // pred_check_branch
            %316 = sbr.rel (0) target = $region82
          $region81: #{drugncf_forward.1} parent=77 // pred_region
            // Predicated region
            $region83: #{drugncf_forward.1} parent=81 // pred_check
              _
            $region84: #{drugncf_forward.1} parent=81 // pred_check_branch
              %318 = sbr.rel (0) target = $region86
            $region85: #{drugncf_forward.1} parent=81 // pred_region
              // Predicated region
              $region98: #{drugncf_forward.1} parent=85 // pred_check
                _
              $region99: #{drugncf_forward.1} parent=85 // pred_check_branch
                %340 = sbr.rel (0) target = $region101
              $region100: #{drugncf_forward.1} parent=85 // pred_region
                loop: start=0, step=1, limit=1
                $region102: #{drugncf_forward.1} parent=100 // loop_pre_header
                  _
                $region103: #{drugncf_forward.1} parent=100 // loop_header
                  %s342 = sphi 0, %s346
                  %p343 = scmp.ge.s32.totalorder %s342, 1
                  %s347 = sphi %s314, %s314
                  %s348 = sphi %s312, %s312
                $region104: #{drugncf_forward.1} parent=100 // loop_header_branch
                  %345 = sbr.rel (%p343) target = $region108
                $region105: #{drugncf_forward.1} parent=100 // loop_body
                  %v349 = vld [vmem:[%s347] sm:$0xff]
                  %350 = vst [vmem:[%s348] sm:$0xff] %v349
                  %v351 = vld [vmem:[%s347 + $0x10] sm:$0xff]
                  %352 = vst [vmem:[%s348 + $0x8] sm:$0xff] %v351
                  %v353 = vld [vmem:[%s347 + $0x20] sm:$0xff]
                  %354 = vst [vmem:[%s348 + $0x10] sm:$0xff] %v353
                  %v355 = vld [vmem:[%s347 + $0x30] sm:$0xff]
                  %356 = vst [vmem:[%s348 + $0x18] sm:$0xff] %v355
                $region106: #{drugncf_forward.1} parent=100 // loop_footer
                  %s346 = sadd.s32 1, %s342
                $region107: #{drugncf_forward.1} parent=100 // loop_footer_branch
                  %341 = sbr.rel target = $region103
                $region108: #{drugncf_forward.1} parent=100 // loop_exit
                  _
              $region101: #{drugncf_forward.1} parent=85 // pred_fallthru
                _
              // Predicated region
              $region109: #{drugncf_forward.1} parent=85 // pred_check
                _
              $region110: #{drugncf_forward.1} parent=85 // pred_check_branch
                %358 = sbr.rel target = $region112
              $region111: #{drugncf_forward.1} parent=85 // pred_region
                _
              $region112: #{drugncf_forward.1} parent=85 // pred_fallthru
                _
            $region86: #{drugncf_forward.1} parent=81 // pred_fallthru
              _
            // Predicated region
            $region87: #{drugncf_forward.1} parent=81 // pred_check
              _
            $region88: #{drugncf_forward.1} parent=81 // pred_check_branch
              %320 = sbr.rel target = $region90
            $region89: #{drugncf_forward.1} parent=81 // pred_region
              %s322 = ssub.s32 256, 1
              loop: start=0, step=1, limit=1
              $region91: #{drugncf_forward.1} parent=89 // loop_pre_header
                _
              $region92: #{drugncf_forward.1} parent=89 // loop_header
                %s324 = sphi 0, %s328
                %p325 = scmp.ge.s32.totalorder %s324, 1
                %s329 = sphi %s314, %s314
                %s330 = sphi %s312, %s312
              $region93: #{drugncf_forward.1} parent=89 // loop_header_branch
                %327 = sbr.rel (%p325) target = $region97
              $region94: #{drugncf_forward.1} parent=89 // loop_body
                %v331 = vld [vmem:[%s329] sm:%s322]
                %332 = vst [vmem:[%s330] sm:%s322] %v331
                %v333 = vld [vmem:[%s329 + $0x10] sm:%s322]
                %334 = vst [vmem:[%s330 + $0x8] sm:%s322] %v333
                %v335 = vld [vmem:[%s329 + $0x20] sm:%s322]
                %336 = vst [vmem:[%s330 + $0x10] sm:%s322] %v335
                %v337 = vld [vmem:[%s329 + $0x30] sm:%s322]
                %338 = vst [vmem:[%s330 + $0x18] sm:%s322] %v337
              $region95: #{drugncf_forward.1} parent=89 // loop_footer
                %s328 = sadd.s32 1, %s324
              $region96: #{drugncf_forward.1} parent=89 // loop_footer_branch
                %323 = sbr.rel target = $region92
              $region97: #{drugncf_forward.1} parent=89 // loop_exit
                _
            $region90: #{drugncf_forward.1} parent=81 // pred_fallthru
              _
          $region82: #{drugncf_forward.1} parent=77 // pred_fallthru
            _
          %359 = vnop
        $region78: #{drugncf_forward.1} parent=31 // pred_fallthru
          _
      $region32: #{drugncf_forward.1} parent=5 // pred_fallthru
        _
      %p360 = scmp.le.s32.totalorder 1, %s16
      %p361 = scmp.lt.s32.totalorder %s16, 3
      %p362 = pnand %p360, %p361
      %p363 = pneg %p362
      // Predicated region
      $region113: #{drugncf_forward.1} parent=5 // pred_check
        _
      $region114: #{drugncf_forward.1} parent=5 // pred_check_branch
        %365 = sbr.rel (%p362) target = $region116
      $region115: #{drugncf_forward.1} parent=5 // pred_region
        %s366 = ssub.s32 %s16, 1
        %s367 = sand.u32 %s55, 1
        %s368 = sand.u32 %s55, 1
        %s369 = smul.addr %s368, 32
        %s370 = scalar_lea.vmem [#allocation2], %s369
        // Predicated region
        $region117: #{drugncf_forward.1} parent=115 // pred_check
          %p371 = pneg %p68
        $region118: #{drugncf_forward.1} parent=115 // pred_check_branch
          %373 = sbr.rel (%p371) target = $region120
        $region119: #{drugncf_forward.1} parent=115 // pred_region
          _
        $region120: #{drugncf_forward.1} parent=115 // pred_fallthru
          _
        %s374 = sand.u32 %s81, 1
        %s375 = sand.u32 %s81, 1
        %s376 = smul.addr %s375, 32
        %s377 = scalar_lea.vmem [#allocation3], %s376
        // Predicated region
        $region121: #{drugncf_forward.1} parent=115 // pred_check
          %p378 = pneg %p94
        $region122: #{drugncf_forward.1} parent=115 // pred_check_branch
          %380 = sbr.rel (%p378) target = $region124
        $region123: #{drugncf_forward.1} parent=115 // pred_region
          _
        $region124: #{drugncf_forward.1} parent=115 // pred_fallthru
          _
        %s381 = smul.u32 16, %s21
        %s382 = ssub.s32 25, %s381
        %p383 = scmp.lt.s32.totalorder %s382, 16
        %s384 = scalar_select %p383, %s382, 16
        %s385 = smul.u32 2, %s384
        %p386 = scmp.lt.s32.totalorder %s381, 24
        %s387 = scalar_select %p386, %s381, 24
        %s388 = smul.addr %s387, 2
        %s389 = scalar_lea.vmem %s0, %s388
        %p390 = pneg %p42
        %p391 = pneg %p39
        %s392 = sand.u32 %s55, 1
        %s393 = sand.u32 %s55, 1
        %s394 = smul.addr %s393, 32
        %s395 = scalar_lea.vmem [#allocation2], %s394
        %p396 = pneg %p68
        %p397 = pneg %p65
        %s398 = sand.u32 %s81, 1
        %s399 = sand.u32 %s81, 1
        %s400 = smul.addr %s399, 32
        %s401 = scalar_lea.vmem [#allocation3], %s400
        %p402 = pneg %p94
        %p403 = pneg %p91
        %p404 = pneg %p115
        %p405 = pneg %p112
        %p406 = pneg %p136
        %p407 = pneg %p133
        %p408 = pneg %p157
        %p409 = pneg %p154
        %p410 = pneg %p178
        %p411 = pneg %p175
        %p412 = pneg %p204
        %p413 = pneg %p201
        %s414 = sand.u32 %s191, 1
        %s415 = scalar_lea.sflag [#allocation5], %s414
        %s416 = sand.u32 %s191, 1
        %s417 = scalar_lea.vmem [#allocation4], %s416
        %s418 = smul.u32 16, %s21
        %s419 = ssub.s32 25, %s418
        %p420 = scmp.lt.s32.totalorder %s419, 16
        %s421 = scalar_select %p420, %s419, 16
        %s422 = smul.u32 2, %s421
        %p423 = scmp.lt.s32.totalorder %s418, 24
        %s424 = scalar_select %p423, %s418, 24
        %s425 = smul.addr %s424, 2
        %s426 = scalar_lea.vmem %s0, %s425
        %s427 = smul.u32 16, %s21
        %s428 = ssub.s32 25, %s427
        %p429 = scmp.lt.s32.totalorder %s428, 16
        %s430 = scalar_select %p429, %s428, 16
        %s431 = smul.u32 2, %s430
        %v432 = vld [vmem:[%s426] sm:$0x3]
        %v433 = vld [vmem:[%s426 + $0x2] sm:$0x3]
        %v434 = vld [vmem:[%s426 + $0x4] sm:$0x3]
        %v435 = vld [vmem:[%s426 + $0x6] sm:$0x3]
        %v436 = vld [vmem:[%s426 + $0x8] sm:$0x3]
        %v437 = vld [vmem:[%s426 + $0xa] sm:$0x3]
        %v438 = vld [vmem:[%s426 + $0xc] sm:$0x3]
        %v439 = vld [vmem:[%s426 + $0xe] sm:$0x3]
        %v440 = vld [vmem:[%s426 + $0x10] sm:$0x3]
        %v441 = vld [vmem:[%s426 + $0x12] sm:$0x3]
        %v442 = vld [vmem:[%s426 + $0x14] sm:$0x3]
        %v443 = vld [vmem:[%s426 + $0x16] sm:$0x3]
        %v444 = vld [vmem:[%s426 + $0x18] sm:$0x3]
        %v445 = vld [vmem:[%s426 + $0x1a] sm:$0x3]
        %v446 = vld [vmem:[%s426 + $0x1c] sm:$0x3]
        %v447 = vld [vmem:[%s426 + $0x1e] sm:$0x3]
        %v448 = vunpack.c.0.s8 %v432
        %v449 = vunpack.c.0.s8 %v433
        %v450 = vunpack.c.0.s8 %v434
        %v451 = vunpack.c.0.s8 %v435
        %v452 = vunpack.c.0.s8 %v436
        %v453 = vunpack.c.0.s8 %v437
        %v454 = vunpack.c.0.s8 %v438
        %v455 = vunpack.c.0.s8 %v439
        %v456 = vunpack.c.0.s8 %v440
        %v457 = vunpack.c.0.s8 %v441
        %v458 = vunpack.c.0.s8 %v442
        %v459 = vunpack.c.0.s8 %v443
        %v460 = vunpack.c.0.s8 %v444
        %v461 = vunpack.c.0.s8 %v445
        %v462 = vunpack.c.0.s8 %v446
        %v463 = vunpack.c.0.s8 %v447
        %v464 = vcvt.s32.f32 %v448
        %v465 = vcvt.s32.f32 %v449
        %v466 = vcvt.s32.f32 %v450
        %v467 = vcvt.s32.f32 %v451
        %v468 = vcvt.s32.f32 %v452
        %v469 = vcvt.s32.f32 %v453
        %v470 = vcvt.s32.f32 %v454
        %v471 = vcvt.s32.f32 %v455
        %v472 = vcvt.s32.f32 %v456
        %v473 = vcvt.s32.f32 %v457
        %v474 = vcvt.s32.f32 %v458
        %v475 = vcvt.s32.f32 %v459
        %v476 = vcvt.s32.f32 %v460
        %v477 = vcvt.s32.f32 %v461
        %v478 = vcvt.s32.f32 %v462
        %v479 = vcvt.s32.f32 %v463
        %v480 = vld [vmem:[%s3] sm:$0xff]
        %v481 = vld [vmem:[%s3 + $0x8] sm:$0xff]
        %v482 = vld [vmem:[%s3 + $0x10] sm:$0xff]
        %v483 = vld [vmem:[%s3 + $0x18] sm:$0xff]
        %v484 = vld [vmem:[%s3 + $0x20] sm:$0xff]
        %v485 = vld [vmem:[%s4] sm:$0xff]
        %v486 = vld [vmem:[%s4 + $0x8] sm:$0xff]
        %v487 = vld [vmem:[%s4 + $0x10] sm:$0xff]
        %v488 = vld [vmem:[%s4 + $0x18] sm:$0xff]
        %v489 = vld [vmem:[%s4 + $0x20] sm:$0xff]
        %491 = vset.pattern.permute.xlu0 0
        %492 = vperm.xlu0 %491, %v485
        %v493 = vpop.permute.xlu0 %492
        %496 = vset.pattern.permute.xlu0 0
        %497 = vperm.xlu0 %496, %v486
        %v498 = vpop.permute.xlu0 %497
        %501 = vset.pattern.permute.xlu0 0
        %502 = vperm.xlu0 %501, %v487
        %v503 = vpop.permute.xlu0 %502
        %506 = vset.pattern.permute.xlu0 0
        %507 = vperm.xlu0 %506, %v488
        %v508 = vpop.permute.xlu0 %507
        %511 = vset.pattern.permute.xlu0 0
        %512 = vperm.xlu0 %511, %v489
        %v513 = vpop.permute.xlu0 %512
        %vm515 = vcmask 523264
        %v517 = vsel %vm515, %v480, 0
        %v520 = vsel %vm515, %v481, 0
        %v523 = vsel %vm515, %v482, 0
        %v526 = vsel %vm515, %v483, 0
        %v529 = vsel %vm515, %v484, 0
        %v532 = vsel %vm515, %v464, 0
        %v535 = vsel %vm515, %v465, 0
        %v538 = vsel %vm515, %v466, 0
        %v541 = vsel %vm515, %v467, 0
        %v544 = vsel %vm515, %v468, 0
        %v547 = vsel %vm515, %v469, 0
        %v550 = vsel %vm515, %v470, 0
        %v553 = vsel %vm515, %v471, 0
        %v556 = vsel %vm515, %v472, 0
        %v559 = vsel %vm515, %v473, 0
        %v562 = vsel %vm515, %v474, 0
        %v565 = vsel %vm515, %v475, 0
        %v568 = vsel %vm515, %v476, 0
        %v571 = vsel %vm515, %v477, 0
        %v574 = vsel %vm515, %v478, 0
        %v577 = vsel %vm515, %v479, 0
        %579 = vmatpush.xpose.msra.mxu0 %v577
        %580 = vmatpush.xpose.msra.mxu0 %v574
        %581 = vmatpush.xpose.msra.mxu0 %v571
        %582 = vmatpush.xpose.msra.mxu0 %v568
        %583 = vmatpush.xpose.msra.mxu0 %v565
        %584 = vmatpush.xpose.msra.mxu0 %v562
        %585 = vmatpush.xpose.msra.mxu0 %v559
        %586 = vmatpush.xpose.msra.mxu0 %v556
        %587 = vmatpush.xpose.msra.mxu0 %v553
        %588 = vmatpush.xpose.msra.mxu0 %v550
        %589 = vmatpush.xpose.msra.mxu0 %v547
        %590 = vmatpush.xpose.msra.mxu0 %v544
        %591 = vmatpush.xpose.msra.mxu0 %v541
        %592 = vmatpush.xpose.msra.mxu0 %v538
        %593 = vmatpush.xpose.msra.mxu0 %v535
        %594 = vmatpush.xpose.msra.mxu0 %v532
        %595 = vmatmul.f32.gmra.mxu0 %v517
        %v596 = vpop.f32.mrf.mxu0
        %v597 = vadd.f32 %v493, %v596
        %598 = vmatmul.f32.gmra.mxu0 %v520
        %v599 = vpop.f32.mrf.mxu0
        %v600 = vadd.f32 %v498, %v599
        %601 = vmatmul.f32.gmra.mxu0 %v523
        %v602 = vpop.f32.mrf.mxu0
        %v603 = vadd.f32 %v503, %v602
        %604 = vmatmul.f32.gmra.mxu0 %v526
        %v605 = vpop.f32.mrf.mxu0
        %v606 = vadd.f32 %v508, %v605
        %607 = vmatmul.f32.gmra.mxu0 %v529
        %v608 = vpop.f32.mrf.mxu0
        %v609 = vadd.f32 %v513, %v608
        %610 = vdwg.mxu0
        %v611 = vmax.f32 %v597, 0.0
        %v612 = vmax.f32 %v600, 0.0
        %v613 = vmax.f32 %v603, 0.0
        %v614 = vmax.f32 %v606, 0.0
        %v615 = vld [vmem:[%s5] sm:$0xff]
        %v616 = vld [vmem:[%s5 + $0x8] sm:$0xff]
        %v617 = vld [vmem:[%s5 + $0x10] sm:$0xff]
        %v618 = vld [vmem:[%s5 + $0x18] sm:$0xff]
        %v619 = vld [vmem:[%s6] sm:$0xff]
        %v620 = vld [vmem:[%s6 + $0x8] sm:$0xff]
        %v621 = vld [vmem:[%s6 + $0x10] sm:$0xff]
        %v622 = vld [vmem:[%s6 + $0x18] sm:$0xff]
        %624 = vset.pattern.permute.xlu0 0
        %625 = vperm.xlu0 %624, %v619
        %v626 = vpop.permute.xlu0 %625
        %629 = vset.pattern.permute.xlu0 0
        %630 = vperm.xlu0 %629, %v620
        %v631 = vpop.permute.xlu0 %630
        %634 = vset.pattern.permute.xlu0 0
        %635 = vperm.xlu0 %634, %v621
        %v636 = vpop.permute.xlu0 %635
        %639 = vset.pattern.permute.xlu0 0
        %640 = vperm.xlu0 %639, %v622
        %v641 = vpop.permute.xlu0 %640
        %vm643 = vcmask 261120
        %v645 = vsel %vm643, %v615, 0
        %v648 = vsel %vm643, %v616, 0
        %v651 = vsel %vm643, %v617, 0
        %v654 = vsel %vm643, %v618, 0
        %656 = vmatpush.msra.mxu0 0.0
        %657 = vmatpush.msra.mxu0 0.0
        %658 = vmatpush.msra.mxu0 0.0
        %659 = vmatpush.msra.mxu0 0.0
        %660 = vmatpush.msra.mxu0 0.0
        %661 = vmatpush.msra.mxu0 0.0
        %662 = vmatpush.msra.mxu0 0.0
        %663 = vmatpush.msra.mxu0 0.0
        %664 = vmatpush.msra.mxu0 0.0
        %665 = vmatpush.msra.mxu0 0.0
        %666 = vmatpush.msra.mxu0 0.0
        %667 = vmatpush.msra.mxu0 0.0
        %668 = vmatpush.msra.mxu0 %v614
        %669 = vmatpush.msra.mxu0 %v613
        %670 = vmatpush.msra.mxu0 %v612
        %671 = vmatpush.msra.mxu0 %v611
        %672 = vmatmul.f32.gmra.mxu0 %v645
        %v673 = vpop.f32.mrf.mxu0
        %v674 = vadd.f32 %v626, %v673
        %675 = vmatmul.f32.gmra.mxu0 %v648
        %v676 = vpop.f32.mrf.mxu0
        %v677 = vadd.f32 %v631, %v676
        %678 = vmatmul.f32.gmra.mxu0 %v651
        %v679 = vpop.f32.mrf.mxu0
        %v680 = vadd.f32 %v636, %v679
        %681 = vmatmul.f32.gmra.mxu0 %v654
        %v682 = vpop.f32.mrf.mxu0
        %v683 = vadd.f32 %v641, %v682
        %684 = vdwg.mxu0
        %v685 = vld [vmem:[%s370] sm:$0xff]
        %v686 = vld [vmem:[%s370 + $0x8] sm:$0xff]
        %v687 = vld [vmem:[%s370 + $0x10] sm:$0xff]
        %v688 = vld [vmem:[%s370 + $0x18] sm:$0xff]
        %v689 = vld [vmem:[%s377] sm:$0xff]
        %v690 = vld [vmem:[%s377 + $0x8] sm:$0xff]
        %v691 = vld [vmem:[%s377 + $0x10] sm:$0xff]
        %v692 = vld [vmem:[%s377 + $0x18] sm:$0xff]
        %v693 = vmul.f32 %v674, 0.5
        %v694 = vmul.f32 %v677, 0.5
        %v695 = vmul.f32 %v680, 0.5
        %v696 = vmul.f32 %v683, 0.5
        %v697 = vmul.f32 %v685, 0.5
        %v698 = vmul.f32 %v686, 0.5
        %v699 = vmul.f32 %v687, 0.5
        %v700 = vmul.f32 %v688, 0.5
        %v701 = vadd.f32 %v693, %v697
        %v702 = vadd.f32 %v694, %v698
        %v703 = vadd.f32 %v695, %v699
        %v704 = vadd.f32 %v696, %v700
        %v705 = vmul.f32 %v609, 0.5
        %v706 = vmul.f32 %v701, %v689
        %v707 = vmul.f32 %v702, %v690
        %v708 = vmul.f32 %v703, %v691
        %v709 = vmul.f32 %v704, %v692
        %v710 = vadd.f32 %v706, %v707
        %v711 = vadd.f32 %v710, %v708
        %v712 = vadd.f32 %v711, %v709
        %v713 = vrot.slane %v712, 4
        %v714 = vadd.f32 %v712, %v713
        %v715 = vrot.slane %v714, 2
        %v716 = vadd.f32 %v714, %v715
        %v717 = vrot.slane %v716, 1
        %v718 = vadd.f32 %v716, %v717
        %v719 = vadd.f32 %v705, %v718
        %v720 = vxor.u32 %v719, 2147483648
        %v721 = vmul.f32 %v720, 1.442695
        %v722 = vpow.pop %v721
        %v723 = vadd.f32 %v722, 1.0
        %v724 = vrcp.pop %v723
        %v725 = vmul.f32 %v723, %v724
        %v726 = vsub.f32 1.0, %v725
        %v727 = vmul.f32 %v724, %v726
        %v728 = vadd.f32 %v724, %v727
        %vm729 = vweird.f32 %v723
        %vm730 = vweird.f32 %v724
        %vm731 = vmor %vm729, %vm730
        %v732 = vsel %vm731, %v724, %v728
        %v733 = vand.u32 2147483647, %v723
        %vm734 = vcmp.eq.f32.partialorder %v733, 8.507059e+37
        %v735 = vand.u32 %v723, 2147483648
        %v736 = vor.u32 1.1754944e-38, %v735
        %v737 = vsel %vm734, %v736, %v732
        %v738 = vmul.f32 1.0, %v737
        %739 = vst [vmem:[%s417] sm:$0x1] %v738
        %s740 = sand.u32 %s191, 1
        %s741 = scalar_lea.sflag [#allocation5], %s740
        %s742 = sand.u32 %s191, 1
        %s743 = scalar_lea.vmem [#allocation4], %s742
        // Predicated region
        $region125: #{drugncf_forward.1} parent=115 // pred_check
          %p744 = pneg %p201
        $region126: #{drugncf_forward.1} parent=115 // pred_check_branch
          %746 = sbr.rel (%p744) target = $region128
        $region127: #{drugncf_forward.1} parent=115 // pred_region
          %748 = vsyncadd %s741, 0
          %s749 = scalar_lea.hbm %s7, %s21
          %s751 = sshll.u32 %s743, 4
          %s752 = int_to_ptr.vmem [resolvable:$true] %s751
          %s753 = sshll.u32 %s749, 4
          %s754 = int_to_ptr.hbm [resolvable:$true] %s753
          %756 = dma.vmem_to_hbm [thread:$0]  %s752, 16, %s754, %s741
        $region128: #{drugncf_forward.1} parent=115 // pred_fallthru
          _
      $region116: #{drugncf_forward.1} parent=5 // pred_fallthru
        _
      %p757 = scmp.le.s32.totalorder 2, %s16
      // Predicated region
      $region129: #{drugncf_forward.1} parent=5 // pred_check
        %p758 = pneg %p757
      $region130: #{drugncf_forward.1} parent=5 // pred_check_branch
        %760 = sbr.rel (%p758) target = $region132
      $region131: #{drugncf_forward.1} parent=5 // pred_region
        %s761 = ssub.s32 %s16, 2
        // Predicated region
        $region133: #{drugncf_forward.1} parent=131 // pred_check
          %p762 = pneg %p207
        $region134: #{drugncf_forward.1} parent=131 // pred_check_branch
          %764 = sbr.rel (%p762) target = $region136
        $region135: #{drugncf_forward.1} parent=131 // pred_region
          %s765 = sand.u32 %s192, 1
          %s766 = scalar_lea.sflag [#allocation5], %s765
          %s767 = sand.u32 %s192, 1
          %s768 = scalar_lea.vmem [#allocation4], %s767
          %770 = dma.done %s766, 16
        $region136: #{drugncf_forward.1} parent=131 // pred_fallthru
          _
      $region132: #{drugncf_forward.1} parent=5 // pred_fallthru
        _
    $region6: #{drugncf_forward.1} parent=1 // loop_footer
      %s20 = sadd.s32 1, %s16
    $region7: #{drugncf_forward.1} parent=1 // loop_footer_branch
      %15 = sbr.rel target = $region3
    $region8: #{drugncf_forward.1} parent=1 // loop_exit
      _
    %771 = vsyncpa [#allocation5], 1
    %s772 = scalar_lea.sflag [#allocation5], 1
    %773 = vsyncpa %s772, 1

</llo_original>
